<compile_context>
chip_gen: v5e
topology: v5e:2x2
jax: 0.10.0
libtpu: 0.0.40
codegen_flags: <defaults>
</compile_context>

<pallas_src>
import jax
import jax.numpy as jnp
from jax.experimental import pallas as pl
from jax.experimental.pallas import tpu as pltpu


# --------------------------------------------------------------------------
# Pallas kernel 1: SIoU between decoded predicted boxes and GT boxes.
# packed: (10, R, 128) f32 slab, leading axis = component:
#   0: raw tx   1: raw ty   2: raw tw   3: raw th
#   4: grid gi  5: grid gj  6: gt x     7: gt y    8: gt w   9: gt h
# Leading-axis indexing keeps every component slice (8,128)-tile aligned.
# --------------------------------------------------------------------------
def _make_siou_kernel(Wf, Hf):
    eps = 1e-7
    thr = 2.0 ** 0.5 / 2.0

    def kernel(p_ref, iou_ref):
        ptx, pty = p_ref[0], p_ref[1]
        ptw, pth = p_ref[2], p_ref[3]
        gi, gj = p_ref[4], p_ref[5]
        gx, gy = p_ref[6], p_ref[7]
        gw, gh = p_ref[8], p_ref[9]

        # decode predicted box (sigmoid via tanh: one EUP push per component)
        b1x = jnp.tanh(ptx) + gi
        b1y = jnp.tanh(pty) + gj
        b1w = (0.5 * jnp.tanh(0.5 * ptw) + 0.5) * Wf
        b1h = (0.5 * jnp.tanh(0.5 * pth) + 0.5) * Hf

        b1_x1, b1_x2 = b1x - 0.5 * b1w, b1x + 0.5 * b1w
        b1_y1, b1_y2 = b1y - 0.5 * b1h, b1y + 0.5 * b1h
        b2_x1, b2_x2 = gx - 0.5 * gw, gx + 0.5 * gw
        b2_y1, b2_y2 = gy - 0.5 * gh, gy + 0.5 * gh

        inter = (jnp.maximum(jnp.minimum(b1_x2, b2_x2) - jnp.maximum(b1_x1, b2_x1), 0.0)
                 * jnp.maximum(jnp.minimum(b1_y2, b2_y2) - jnp.maximum(b1_y1, b2_y1), 0.0))
        w1, h1 = b1_x2 - b1_x1, b1_y2 - b1_y1 + eps
        w2, h2 = b2_x2 - b2_x1, b2_y2 - b2_y1 + eps
        union = w1 * h1 + w2 * h2 - inter + eps
        iou = inter / union                                  # exact divide

        cw = jnp.maximum(b1_x2, b2_x2) - jnp.minimum(b1_x1, b2_x1)
        ch = jnp.maximum(b1_y2, b2_y2) - jnp.minimum(b1_y1, b2_y1)
        s_cw = (b2_x1 + b2_x2 - b1_x1 - b1_x2) * 0.5
        s_ch = (b2_y1 + b2_y2 - b1_y1 - b1_y2) * 0.5
        sigma = jnp.sqrt(s_cw * s_cw + s_ch * s_ch)
        sin_a1 = jnp.abs(s_cw) / sigma
        sin_a2 = jnp.abs(s_ch) / sigma
        sin_a = jnp.where(sin_a1 > thr, sin_a2, sin_a1)
        # cos(2*arcsin(s) - pi/2) == 2*s*sqrt(1-s^2)  (exact identity)
        angle_cost = 2.0 * sin_a * jnp.sqrt(jnp.maximum(1.0 - sin_a * sin_a, 0.0))
        rho_x = (s_cw / cw) ** 2
        rho_y = (s_ch / ch) ** 2
        gamma = angle_cost - 2.0
        distance_cost = 2.0 - jnp.exp(gamma * rho_x) - jnp.exp(gamma * rho_y)
        omiga_w = jnp.abs(w1 - w2) / jnp.maximum(w1, w2)
        omiga_h = jnp.abs(h1 - h2) / jnp.maximum(h1, h2)
        sw = (1.0 - jnp.exp(-omiga_w)) ** 2
        sh = (1.0 - jnp.exp(-omiga_h)) ** 2
        shape_cost = sw * sw + sh * sh                       # (...)^4 each

        iou_ref[...] = iou - 0.5 * (distance_cost + shape_cost)

    return kernel


def siou_pallas(packed, R, W, H):
    # TODO(synk): for very large M, grid this over blocks of the R axis so the
    # slab DMA double-buffers instead of landing as one block.
    return pl.pallas_call(
        _make_siou_kernel(float(W), float(H)),
        out_shape=jax.ShapeDtypeStruct((R, 128), jnp.float32),
        in_specs=[pl.BlockSpec(memory_space=pltpu.MemorySpace.VMEM)],
        out_specs=pl.BlockSpec(memory_space=pltpu.MemorySpace.VMEM),
    )(packed)


# --------------------------------------------------------------------------
# Pallas kernel 2: sum(SmoothL1(pobj, 0) * 0.75) over the whole feature map.
# Single HBM stream, lane-dense (rows,128) slab, 2048-row blocks,
# leading 'parallel' axis for v7x's two TensorCores.
# --------------------------------------------------------------------------
def obj_base_sum_pallas(pobj):
    T = pobj.size
    lanes = 128
    rows_raw = -(-T // lanes)
    NC = 2                                    # megacore split (serial on v5e/v6e)
    per_core = -(-rows_raw // NC)
    RB = max(8, min(2048, ((per_core + 7) // 8) * 8))
    blocks_per_core = -(-rows_raw // (NC * RB))
    rows_pad = NC * blocks_per_core * RB

    flat = jnp.pad(pobj.reshape(-1), (0, rows_pad * lanes - T))   # zero pad -> 0 loss
    flat = flat.reshape(rows_pad, lanes)

    def kernel(p_ref, o_ref, acc_ref):
        j = pl.program_id(1)

        @pl.when(j == 0)
        def _():
            acc_ref[...] = jnp.zeros_like(acc_ref)

        x = p_ref[...].astype(jnp.float32)                 # native dtype in, f32 math
        ax = jnp.abs(x)
        sl1 = jnp.where(ax < 1.0, 0.5 * x * x, ax - 0.5)   # SmoothL1 vs 0, beta=1
        v = sl1 * 0.75
        acc_ref[...] += jnp.sum(v.reshape(RB // 8, 8, lanes), axis=0)

        @pl.when(j == pl.num_programs(1) - 1)
        def _():
            o_ref[0] = acc_ref[...]

    out = pl.pallas_call(
        kernel,
        out_shape=jax.ShapeDtypeStruct((NC, 8, lanes), jnp.float32),
        grid_spec=pltpu.PrefetchScalarGridSpec(
            num_scalar_prefetch=0,
            grid=(NC, blocks_per_core),
            in_specs=[pl.BlockSpec((RB, lanes),
                                   lambda c, j: (c * blocks_per_core + j, 0))],
            out_specs=pl.BlockSpec((1, 8, lanes), lambda c, j: (c, 0, 0)),
            scratch_shapes=[pltpu.VMEM((8, lanes), jnp.float32)],
        ),
        compiler_params=pltpu.CompilerParams(
            dimension_semantics=("parallel", "arbitrary")),
    )(flat)
    return jnp.sum(out)


def _smooth_l1(x, t):
    d = x - t
    ad = jnp.abs(d)
    return jnp.where(ad < 1.0, 0.5 * d * d, ad - 0.5)


# --------------------------------------------------------------------------
# Forward pass (glue in plain JAX, hot paths in the Pallas kernels above).
# --------------------------------------------------------------------------
def detector_loss(preds, targets):
    N, C, H, W = preds.shape
    M = targets.shape[0]

    pobj = preds[:, 0]                        # (N,H,W), straight from NCHW, native dtype
    base_sum = obj_base_sum_pallas(pobj)      # sum SmoothL1(pobj,0)*0.75 (one HBM stream)
    denom = float(N * H * W)

    if M == 0:
        zero = jnp.float32(0.0)
        obj_loss = base_sum / denom
        return zero, obj_loss, zero, obj_loss * 16.0

    # ---- build_target (fixed-size candidates + validity mask) ----
    scale = jnp.array([1.0, 1.0, W, H, W, H], dtype=jnp.float32)
    gt = targets.astype(jnp.float32) * scale                    # (M, 6)
    gt4 = jnp.broadcast_to(gt[None], (4, M, 6))
    quadrant = jnp.array([[0, 0], [1, 0], [0, 1], [1, 1]], dtype=jnp.int32)
    quad = jnp.broadcast_to(quadrant[:, None, :], (4, M, 2))
    gij = gt4[..., 2:4].astype(jnp.int32) + quad                # (4, M, 2)
    # NOTE: reference bounds both coords by H (its square-grid assumption) - kept.
    valid = (jnp.min(jnp.where(gij < H, gij, 0), axis=-1) > 0).reshape(-1)

    gi = gij[..., 0].reshape(-1)               # W-index
    gj = gij[..., 1].reshape(-1)               # H-index
    b = gt4[..., 0].astype(jnp.int32).reshape(-1)
    gbox = gt4[..., 2:].reshape(-1, 4)
    gcls = gt4[..., 1].astype(jnp.int32).reshape(-1)
    K = 4 * M

    bc = jnp.clip(b, 0, N - 1)
    gic = jnp.clip(gi, 0, W - 1)
    gjc = jnp.clip(gj, 0, H - 1)

    # single per-candidate gather from NCHW (obj, reg, cls channels)
    cand = preds[bc, :, gjc, gic].astype(jnp.float32)           # (K, C)
    pobj_k = cand[:, 0]
    pr = cand[:, 1:5]
    pc = cand[:, 5:]

    Kp = ((K + 127) // 128) * 128
    R = Kp // 128

    def lane_slab(v, fill):
        v = jnp.pad(v.astype(jnp.float32), (0, Kp - K), constant_values=fill)
        return v.reshape(R, 128)

    # benign pad values: padded lanes never hit 0/0 inside the kernel
    packed = jnp.stack([
        lane_slab(pr[:, 0], 0.0), lane_slab(pr[:, 1], 0.0),       # raw tx | ty
        lane_slab(pr[:, 2], 0.0), lane_slab(pr[:, 3], 0.0),       # raw tw | th
        lane_slab(gi, 0.0), lane_slab(gj, 0.0),                   # grid gi | gj
        lane_slab(gbox[:, 0], 0.5), lane_slab(gbox[:, 1], 0.5),   # gt x | y
        lane_slab(gbox[:, 2], 1.0), lane_slab(gbox[:, 3], 1.0),   # gt w | h
    ], axis=0)                                                    # (10, R, 128)

    iou = siou_pallas(packed, R, W, H).reshape(-1)[:K]            # (K,)

    nv = jnp.maximum(jnp.sum(valid.astype(jnp.float32)), 1.0)
    iou_mean = jnp.sum(jnp.where(valid, iou, 0.0)) / nv
    f = valid & (iou > iou_mean)
    nf = jnp.maximum(jnp.sum(f.astype(jnp.float32)), 1.0)

    iou_loss = jnp.sum(jnp.where(f, 1.0 - iou, 0.0)) / nf

    # NLLLoss(log(pcls), gt_cls) over filtered candidates
    # (reference assumes class channels strictly in (0,1); kept as-is)
    logp = jnp.log(pc)
    sel = jnp.take_along_axis(logp, jnp.clip(gcls, 0, C - 6)[:, None], axis=1)[:, 0]
    cls_loss = jnp.sum(jnp.where(f, -sel, 0.0)) / nf

    # ---- obj loss: base (tobj=0, factor=0.75 everywhere) + K-sized correction
    # bincount(b[f]) over all filtered candidates (duplicates included, as ref)
    nb = jnp.zeros((N,), jnp.float32).at[jnp.where(f, bc, N)].add(
        jnp.where(f, 1.0, 0.0), mode='drop')
    fac = (H * W) / jnp.maximum(nb[bc], 1.0) * 0.25

    # de-duplicate candidate cells: PyTorch scatter is last-write-wins, so only
    # the LAST filtered candidate touching a cell contributes a correction.
    cell = bc * (H * W) + gjc * W + gic
    idx = jnp.arange(K)
    dup_later = jnp.any((cell[None, :] == cell[:, None])
                        & (idx[None, :] > idx[:, None]) & f[None, :], axis=1)
    keep = f & ~dup_later
    # TODO(synk): O(K^2) dedup mask; switch to a sort-based unique for very large M.

    corr = _smooth_l1(pobj_k, iou) * fac - _smooth_l1(pobj_k, 0.0) * 0.75
    correction = jnp.sum(jnp.where(keep, corr, 0.0))

    obj_loss = (base_sum + correction) / denom
    loss = iou_loss * 8.0 + obj_loss * 16.0 + cls_loss
    return iou_loss, obj_loss, cls_loss, loss


if __name__ == "__main__":
    N, H, W = 2, 16, 16
    num_classes = 3
    C = 5 + num_classes                      # [obj, reg(4), cls(nc)]
    M = 6

    key = jax.random.PRNGKey(0)
    k1, k2, k3, k4 = jax.random.split(key, 4)
    # preds: class/obj channels kept in (0, 1) so log() is valid (as the
    # PyTorch module implicitly assumes).
    preds = jax.random.uniform(k1, (N, C, H, W), jnp.float32, 0.05, 0.95)
    tb = jax.random.randint(k2, (M, 1), 0, N).astype(jnp.float32)
    tc = jax.random.randint(k3, (M, 1), 0, num_classes).astype(jnp.float32)
    txywh = jax.random.uniform(k4, (M, 4), jnp.float32, 0.15, 0.85)
    targets = jnp.concatenate([tb, tc, txywh], axis=1)   # (M, 6)

    loss_fn = jax.jit(detector_loss)
    iou_loss, obj_loss, cls_loss, loss = loss_fn(preds, targets)
    jax.block_until_ready((iou_loss, obj_loss, cls_loss, loss))
    print("KERNEL_OK")
</pallas_src>

<mosaic_0001>
module attributes {stable_mosaic.version = 11 : i64} {
  func.func @kernel(%arg0: i32, %arg1: i32, %arg2: memref<8x128xf32, #tpu.memory_space<vmem>>, %arg3: memref<1x8x128xf32, #tpu.memory_space<vmem>>, %arg4: memref<8x128xf32, #tpu.memory_space<vmem>>) attributes {dimension_semantics = [#tpu.dimension_semantics<parallel>, #tpu.dimension_semantics<arbitrary>], iteration_bounds = array<i64: 2, 1>, scalar_prefetch = 0 : i64, scratch_operands = 1 : i64, tpu.core_type = #tpu.core_type<tc>, window_params = [{transform_indices = @transform_0, window_bounds = array<i64: 8, 128>}, {transform_indices = @transform_1, window_bounds = array<i64: 1, 8, 128>}]} {
    %c0_i32 = arith.constant 0 : i32
    %0 = arith.cmpi eq, %arg1, %c0_i32 : i32
    %1 = arith.extui %0 : i1 to i32
    %c0_i32_0 = arith.constant 0 : i32
    %2 = arith.cmpi ne, %1, %c0_i32_0 : i32
    scf.if %2 {
      %cst_12 = arith.constant 0.000000e+00 : f32
      %23 = vector.broadcast %cst_12 : f32 to vector<8x128xf32>
      %c0_13 = arith.constant 0 : index
      %c0_14 = arith.constant 0 : index
      %24 = vector.load %arg4[%c0_13, %c0_14] : memref<8x128xf32, #tpu.memory_space<vmem>>, vector<8x128xf32>
      tpu.vector_store %arg4[%c0_13, %c0_14], %23 {strides = array<i32>} : memref<8x128xf32, #tpu.memory_space<vmem>>, vector<8x128xf32>,
    } else {
    }
    %c0 = arith.constant 0 : index
    %c0_1 = arith.constant 0 : index
    %3 = vector.load %arg2[%c0, %c0_1] : memref<8x128xf32, #tpu.memory_space<vmem>>, vector<8x128xf32>
    %4 = math.absf %3 : vector<8x128xf32>
    %cst = arith.constant 1.000000e+00 : f32
    %5 = vector.broadcast %cst : f32 to vector<8x128xf32>
    %6 = arith.cmpf olt, %4, %5 : vector<8x128xf32>
    %cst_2 = arith.constant 5.000000e-01 : f32
    %7 = vector.broadcast %cst_2 : f32 to vector<8x128xf32>
    %8 = arith.mulf %7, %3 : vector<8x128xf32>
    %9 = arith.mulf %8, %3 : vector<8x128xf32>
    %cst_3 = arith.constant 5.000000e-01 : f32
    %10 = vector.broadcast %cst_3 : f32 to vector<8x128xf32>
    %11 = arith.subf %4, %10 : vector<8x128xf32>
    %12 = arith.select %6, %9, %11 : vector<8x128xi1>, vector<8x128xf32>
    %cst_4 = arith.constant 7.500000e-01 : f32
    %13 = vector.broadcast %cst_4 : f32 to vector<8x128xf32>
    %14 = arith.mulf %12, %13 : vector<8x128xf32>
    %c0_5 = arith.constant 0 : index
    %c0_6 = arith.constant 0 : index
    %15 = vector.load %arg4[%c0_5, %c0_6] : memref<8x128xf32, #tpu.memory_space<vmem>>, vector<8x128xf32>
    %16 = vector.shape_cast %14 : vector<8x128xf32> to vector<1x8x128xf32>
    %cst_7 = arith.constant dense<0.000000e+00> : vector<8x128xf32>
    %17 = vector.multi_reduction <add>, %16, %cst_7 [0] : vector<1x8x128xf32> to vector<8x128xf32>
    %18 = arith.addf %15, %17 : vector<8x128xf32>
    %c0_8 = arith.constant 0 : index
    %c0_9 = arith.constant 0 : index
    %19 = vector.load %arg4[%c0_8, %c0_9] : memref<8x128xf32, #tpu.memory_space<vmem>>, vector<8x128xf32>
    tpu.vector_store %arg4[%c0_8, %c0_9], %18 {strides = array<i32>} : memref<8x128xf32, #tpu.memory_space<vmem>>, vector<8x128xf32>,
    %c0_i32_10 = arith.constant 0 : i32
    %20 = arith.cmpi eq, %arg1, %c0_i32_10 : i32
    %21 = arith.extui %20 : i1 to i32
    %c0_i32_11 = arith.constant 0 : i32
    %22 = arith.cmpi ne, %21, %c0_i32_11 : i32
    scf.if %22 {
      %c0_12 = arith.constant 0 : index
      %c0_13 = arith.constant 0 : index
      %23 = vector.load %arg4[%c0_12, %c0_13] : memref<8x128xf32, #tpu.memory_space<vmem>>, vector<8x128xf32>
      %c0_14 = arith.constant 0 : index
      %c0_15 = arith.constant 0 : index
      %c0_16 = arith.constant 0 : index
      %24 = vector.load %arg3[%c0_14, %c0_15, %c0_16] : memref<1x8x128xf32, #tpu.memory_space<vmem>>, vector<1x8x128xf32>
      %25 = vector.shape_cast %24 : vector<1x8x128xf32> to vector<8x128xf32>
      %26 = vector.shape_cast %23 : vector<8x128xf32> to vector<1x8x128xf32>
      tpu.vector_store %arg3[%c0_14, %c0_15, %c0_16], %26 {strides = array<i32>} : memref<1x8x128xf32, #tpu.memory_space<vmem>>, vector<1x8x128xf32>,
    } else {
    }
    return
  }
  func.func @transform_0(%arg0: i32, %arg1: i32) -> (i32, i32) {
    %c1_i32 = arith.constant 1 : i32
    %0 = arith.muli %arg0, %c1_i32 : i32
    %1 = arith.addi %0, %arg1 : i32
    %c0_i32 = arith.constant 0 : i32
    %c0_i32_0 = arith.constant 0 : i32
    return %1, %c0_i32 : i32, i32
  }
  func.func @transform_1(%arg0: i32, %arg1: i32) -> (i32, i32, i32) {
    %c0_i32 = arith.constant 0 : i32
    %c0_i32_0 = arith.constant 0 : i32
    %c0_i32_1 = arith.constant 0 : i32
    return %arg0, %c0_i32, %c0_i32_0 : i32, i32, i32
  }
}

module attributes {stable_mosaic.version = 11 : i64} {
  func.func @kernel(%arg0: memref<10x1x128xf32, #tpu.memory_space<vmem>>, %arg1: memref<1x128xf32, #tpu.memory_space<vmem>>) attributes {dimension_semantics = [], scalar_prefetch = 0 : i64, scratch_operands = 0 : i64, tpu.core_type = #tpu.core_type<tc>} {
    %c0 = arith.constant 0 : index
    %c0_0 = arith.constant 0 : index
    %c0_1 = arith.constant 0 : index
    %0 = vector.load %arg0[%c0, %c0_0, %c0_1] : memref<10x1x128xf32, #tpu.memory_space<vmem>>, vector<1x1x128xf32>
    %1 = vector.shape_cast %0 : vector<1x1x128xf32> to vector<1x128xf32>
    %c1 = arith.constant 1 : index
    %c0_2 = arith.constant 0 : index
    %c0_3 = arith.constant 0 : index
    %2 = vector.load %arg0[%c1, %c0_2, %c0_3] : memref<10x1x128xf32, #tpu.memory_space<vmem>>, vector<1x1x128xf32>
    %3 = vector.shape_cast %2 : vector<1x1x128xf32> to vector<1x128xf32>
    %c2 = arith.constant 2 : index
    %c0_4 = arith.constant 0 : index
    %c0_5 = arith.constant 0 : index
    %4 = vector.load %arg0[%c2, %c0_4, %c0_5] : memref<10x1x128xf32, #tpu.memory_space<vmem>>, vector<1x1x128xf32>
    %5 = vector.shape_cast %4 : vector<1x1x128xf32> to vector<1x128xf32>
    %c3 = arith.constant 3 : index
    %c0_6 = arith.constant 0 : index
    %c0_7 = arith.constant 0 : index
    %6 = vector.load %arg0[%c3, %c0_6, %c0_7] : memref<10x1x128xf32, #tpu.memory_space<vmem>>, vector<1x1x128xf32>
    %7 = vector.shape_cast %6 : vector<1x1x128xf32> to vector<1x128xf32>
    %c4 = arith.constant 4 : index
    %c0_8 = arith.constant 0 : index
    %c0_9 = arith.constant 0 : index
    %8 = vector.load %arg0[%c4, %c0_8, %c0_9] : memref<10x1x128xf32, #tpu.memory_space<vmem>>, vector<1x1x128xf32>
    %9 = vector.shape_cast %8 : vector<1x1x128xf32> to vector<1x128xf32>
    %c5 = arith.constant 5 : index
    %c0_10 = arith.constant 0 : index
    %c0_11 = arith.constant 0 : index
    %10 = vector.load %arg0[%c5, %c0_10, %c0_11] : memref<10x1x128xf32, #tpu.memory_space<vmem>>, vector<1x1x128xf32>
    %11 = vector.shape_cast %10 : vector<1x1x128xf32> to vector<1x128xf32>
    %c6 = arith.constant 6 : index
    %c0_12 = arith.constant 0 : index
    %c0_13 = arith.constant 0 : index
    %12 = vector.load %arg0[%c6, %c0_12, %c0_13] : memref<10x1x128xf32, #tpu.memory_space<vmem>>, vector<1x1x128xf32>
    %13 = vector.shape_cast %12 : vector<1x1x128xf32> to vector<1x128xf32>
    %c7 = arith.constant 7 : index
    %c0_14 = arith.constant 0 : index
    %c0_15 = arith.constant 0 : index
    %14 = vector.load %arg0[%c7, %c0_14, %c0_15] : memref<10x1x128xf32, #tpu.memory_space<vmem>>, vector<1x1x128xf32>
    %15 = vector.shape_cast %14 : vector<1x1x128xf32> to vector<1x128xf32>
    %c8 = arith.constant 8 : index
    %c0_16 = arith.constant 0 : index
    %c0_17 = arith.constant 0 : index
    %16 = vector.load %arg0[%c8, %c0_16, %c0_17] : memref<10x1x128xf32, #tpu.memory_space<vmem>>, vector<1x1x128xf32>
    %17 = vector.shape_cast %16 : vector<1x1x128xf32> to vector<1x128xf32>
    %c9 = arith.constant 9 : index
    %c0_18 = arith.constant 0 : index
    %c0_19 = arith.constant 0 : index
    %18 = vector.load %arg0[%c9, %c0_18, %c0_19] : memref<10x1x128xf32, #tpu.memory_space<vmem>>, vector<1x1x128xf32>
    %19 = vector.shape_cast %18 : vector<1x1x128xf32> to vector<1x128xf32>
    %20 = math.tanh %1 : vector<1x128xf32>
    %21 = arith.addf %20, %9 : vector<1x128xf32>
    %22 = math.tanh %3 : vector<1x128xf32>
    %23 = arith.addf %22, %11 : vector<1x128xf32>
    %cst = arith.constant 5.000000e-01 : f32
    %24 = vector.broadcast %cst : f32 to vector<1x128xf32>
    %25 = arith.mulf %24, %5 : vector<1x128xf32>
    %26 = math.tanh %25 : vector<1x128xf32>
    %cst_20 = arith.constant 5.000000e-01 : f32
    %27 = vector.broadcast %cst_20 : f32 to vector<1x128xf32>
    %28 = arith.mulf %27, %26 : vector<1x128xf32>
    %cst_21 = arith.constant 5.000000e-01 : f32
    %29 = vector.broadcast %cst_21 : f32 to vector<1x128xf32>
    %30 = arith.addf %28, %29 : vector<1x128xf32>
    %cst_22 = arith.constant 1.600000e+01 : f32
    %31 = vector.broadcast %cst_22 : f32 to vector<1x128xf32>
    %32 = arith.mulf %30, %31 : vector<1x128xf32>
    %cst_23 = arith.constant 5.000000e-01 : f32
    %33 = vector.broadcast %cst_23 : f32 to vector<1x128xf32>
    %34 = arith.mulf %33, %7 : vector<1x128xf32>
    %35 = math.tanh %34 : vector<1x128xf32>
    %cst_24 = arith.constant 5.000000e-01 : f32
    %36 = vector.broadcast %cst_24 : f32 to vector<1x128xf32>
    %37 = arith.mulf %36, %35 : vector<1x128xf32>
    %cst_25 = arith.constant 5.000000e-01 : f32
    %38 = vector.broadcast %cst_25 : f32 to vector<1x128xf32>
    %39 = arith.addf %37, %38 : vector<1x128xf32>
    %cst_26 = arith.constant 1.600000e+01 : f32
    %40 = vector.broadcast %cst_26 : f32 to vector<1x128xf32>
    %41 = arith.mulf %39, %40 : vector<1x128xf32>
    %cst_27 = arith.constant 5.000000e-01 : f32
    %42 = vector.broadcast %cst_27 : f32 to vector<1x128xf32>
    %43 = arith.mulf %42, %32 : vector<1x128xf32>
    %44 = arith.subf %21, %43 : vector<1x128xf32>
    %cst_28 = arith.constant 5.000000e-01 : f32
    %45 = vector.broadcast %cst_28 : f32 to vector<1x128xf32>
    %46 = arith.mulf %45, %32 : vector<1x128xf32>
    %47 = arith.addf %21, %46 : vector<1x128xf32>
    %cst_29 = arith.constant 5.000000e-01 : f32
    %48 = vector.broadcast %cst_29 : f32 to vector<1x128xf32>
    %49 = arith.mulf %48, %41 : vector<1x128xf32>
    %50 = arith.subf %23, %49 : vector<1x128xf32>
    %cst_30 = arith.constant 5.000000e-01 : f32
    %51 = vector.broadcast %cst_30 : f32 to vector<1x128xf32>
    %52 = arith.mulf %51, %41 : vector<1x128xf32>
    %53 = arith.addf %23, %52 : vector<1x128xf32>
    %cst_31 = arith.constant 5.000000e-01 : f32
    %54 = vector.broadcast %cst_31 : f32 to vector<1x128xf32>
    %55 = arith.mulf %54, %17 : vector<1x128xf32>
    %56 = arith.subf %13, %55 : vector<1x128xf32>
    %cst_32 = arith.constant 5.000000e-01 : f32
    %57 = vector.broadcast %cst_32 : f32 to vector<1x128xf32>
    %58 = arith.mulf %57, %17 : vector<1x128xf32>
    %59 = arith.addf %13, %58 : vector<1x128xf32>
    %cst_33 = arith.constant 5.000000e-01 : f32
    %60 = vector.broadcast %cst_33 : f32 to vector<1x128xf32>
    %61 = arith.mulf %60, %19 : vector<1x128xf32>
    %62 = arith.subf %15, %61 : vector<1x128xf32>
    %cst_34 = arith.constant 5.000000e-01 : f32
    %63 = vector.broadcast %cst_34 : f32 to vector<1x128xf32>
    %64 = arith.mulf %63, %19 : vector<1x128xf32>
    %65 = arith.addf %15, %64 : vector<1x128xf32>
    %66 = arith.minimumf %47, %59 : vector<1x128xf32>
    %67 = arith.maximumf %44, %56 : vector<1x128xf32>
    %68 = arith.subf %66, %67 : vector<1x128xf32>
    %cst_35 = arith.constant 0.000000e+00 : f32
    %69 = vector.broadcast %cst_35 : f32 to vector<1x128xf32>
    %70 = arith.maximumf %68, %69 : vector<1x128xf32>
    %71 = arith.minimumf %53, %65 : vector<1x128xf32>
    %72 = arith.maximumf %50, %62 : vector<1x128xf32>
    %73 = arith.subf %71, %72 : vector<1x128xf32>
    %cst_36 = arith.constant 0.000000e+00 : f32
    %74 = vector.broadcast %cst_36 : f32 to vector<1x128xf32>
    %75 = arith.maximumf %73, %74 : vector<1x128xf32>
    %76 = arith.mulf %70, %75 : vector<1x128xf32>
    %77 = arith.subf %47, %44 : vector<1x128xf32>
    %78 = arith.subf %53, %50 : vector<1x128xf32>
    %cst_37 = arith.constant 1.000000e-07 : f32
    %79 = vector.broadcast %cst_37 : f32 to vector<1x128xf32>
    %80 = arith.addf %78, %79 : vector<1x128xf32>
    %81 = arith.subf %59, %56 : vector<1x128xf32>
    %82 = arith.subf %65, %62 : vector<1x128xf32>
    %cst_38 = arith.constant 1.000000e-07 : f32
    %83 = vector.broadcast %cst_38 : f32 to vector<1x128xf32>
    %84 = arith.addf %82, %83 : vector<1x128xf32>
    %85 = arith.mulf %77, %80 : vector<1x128xf32>
    %86 = arith.mulf %81, %84 : vector<1x128xf32>
    %87 = arith.addf %85, %86 : vector<1x128xf32>
    %88 = arith.subf %87, %76 : vector<1x128xf32>
    %cst_39 = arith.constant 1.000000e-07 : f32
    %89 = vector.broadcast %cst_39 : f32 to vector<1x128xf32>
    %90 = arith.addf %88, %89 : vector<1x128xf32>
    %91 = arith.divf %76, %90 : vector<1x128xf32>
    %92 = arith.maximumf %47, %59 : vector<1x128xf32>
    %93 = arith.minimumf %44, %56 : vector<1x128xf32>
    %94 = arith.subf %92, %93 : vector<1x128xf32>
    %95 = arith.maximumf %53, %65 : vector<1x128xf32>
    %96 = arith.minimumf %50, %62 : vector<1x128xf32>
    %97 = arith.subf %95, %96 : vector<1x128xf32>
    %98 = arith.addf %56, %59 : vector<1x128xf32>
    %99 = arith.subf %98, %44 : vector<1x128xf32>
    %100 = arith.subf %99, %47 : vector<1x128xf32>
    %cst_40 = arith.constant 5.000000e-01 : f32
    %101 = vector.broadcast %cst_40 : f32 to vector<1x128xf32>
    %102 = arith.mulf %100, %101 : vector<1x128xf32>
    %103 = arith.addf %62, %65 : vector<1x128xf32>
    %104 = arith.subf %103, %50 : vector<1x128xf32>
    %105 = arith.subf %104, %53 : vector<1x128xf32>
    %cst_41 = arith.constant 5.000000e-01 : f32
    %106 = vector.broadcast %cst_41 : f32 to vector<1x128xf32>
    %107 = arith.mulf %105, %106 : vector<1x128xf32>
    %108 = arith.mulf %102, %102 : vector<1x128xf32>
    %109 = arith.mulf %107, %107 : vector<1x128xf32>
    %110 = arith.addf %108, %109 : vector<1x128xf32>
    %111 = math.sqrt %110 : vector<1x128xf32>
    %112 = math.absf %102 : vector<1x128xf32>
    %113 = arith.divf %112, %111 : vector<1x128xf32>
    %114 = math.absf %107 : vector<1x128xf32>
    %115 = arith.divf %114, %111 : vector<1x128xf32>
    %cst_42 = arith.constant 0.707106769 : f32
    %116 = vector.broadcast %cst_42 : f32 to vector<1x128xf32>
    %117 = arith.cmpf ogt, %113, %116 : vector<1x128xf32>
    %118 = arith.select %117, %115, %113 : vector<1x128xi1>, vector<1x128xf32>
    %cst_43 = arith.constant 2.000000e+00 : f32
    %119 = vector.broadcast %cst_43 : f32 to vector<1x128xf32>
    %120 = arith.mulf %119, %118 : vector<1x128xf32>
    %121 = arith.mulf %118, %118 : vector<1x128xf32>
    %cst_44 = arith.constant 1.000000e+00 : f32
    %122 = vector.broadcast %cst_44 : f32 to vector<1x128xf32>
    %123 = arith.subf %122, %121 : vector<1x128xf32>
    %cst_45 = arith.constant 0.000000e+00 : f32
    %124 = vector.broadcast %cst_45 : f32 to vector<1x128xf32>
    %125 = arith.maximumf %123, %124 : vector<1x128xf32>
    %126 = math.sqrt %125 : vector<1x128xf32>
    %127 = arith.mulf %120, %126 : vector<1x128xf32>
    %128 = arith.divf %102, %94 : vector<1x128xf32>
    %129 = arith.mulf %128, %128 : vector<1x128xf32>
    %130 = arith.divf %107, %97 : vector<1x128xf32>
    %131 = arith.mulf %130, %130 : vector<1x128xf32>
    %cst_46 = arith.constant 2.000000e+00 : f32
    %132 = vector.broadcast %cst_46 : f32 to vector<1x128xf32>
    %133 = arith.subf %127, %132 : vector<1x128xf32>
    %134 = arith.mulf %133, %129 : vector<1x128xf32>
    %135 = math.exp %134 : vector<1x128xf32>
    %cst_47 = arith.constant 2.000000e+00 : f32
    %136 = vector.broadcast %cst_47 : f32 to vector<1x128xf32>
    %137 = arith.subf %136, %135 : vector<1x128xf32>
    %138 = arith.mulf %133, %131 : vector<1x128xf32>
    %139 = math.exp %138 : vector<1x128xf32>
    %140 = arith.subf %137, %139 : vector<1x128xf32>
    %141 = arith.subf %77, %81 : vector<1x128xf32>
    %142 = math.absf %141 : vector<1x128xf32>
    %143 = arith.maximumf %77, %81 : vector<1x128xf32>
    %144 = arith.divf %142, %143 : vector<1x128xf32>
    %145 = arith.subf %80, %84 : vector<1x128xf32>
    %146 = math.absf %145 : vector<1x128xf32>
    %147 = arith.maximumf %80, %84 : vector<1x128xf32>
    %148 = arith.divf %146, %147 : vector<1x128xf32>
    %cst_48 = arith.constant 0.000000e+00 : f32
    %149 = vector.broadcast %cst_48 : f32 to vector<1x128xf32>
    %150 = arith.subf %149, %144 : vector<1x128xf32>
    %151 = math.exp %150 : vector<1x128xf32>
    %cst_49 = arith.constant 1.000000e+00 : f32
    %152 = vector.broadcast %cst_49 : f32 to vector<1x128xf32>
    %153 = arith.subf %152, %151 : vector<1x128xf32>
    %154 = arith.mulf %153, %153 : vector<1x128xf32>
    %cst_50 = arith.constant 0.000000e+00 : f32
    %155 = vector.broadcast %cst_50 : f32 to vector<1x128xf32>
    %156 = arith.subf %155, %148 : vector<1x128xf32>
    %157 = math.exp %156 : vector<1x128xf32>
    %cst_51 = arith.constant 1.000000e+00 : f32
    %158 = vector.broadcast %cst_51 : f32 to vector<1x128xf32>
    %159 = arith.subf %158, %157 : vector<1x128xf32>
    %160 = arith.mulf %159, %159 : vector<1x128xf32>
    %161 = arith.mulf %154, %154 : vector<1x128xf32>
    %162 = arith.mulf %160, %160 : vector<1x128xf32>
    %163 = arith.addf %161, %162 : vector<1x128xf32>
    %164 = arith.addf %140, %163 : vector<1x128xf32>
    %cst_52 = arith.constant 5.000000e-01 : f32
    %165 = vector.broadcast %cst_52 : f32 to vector<1x128xf32>
    %166 = arith.mulf %165, %164 : vector<1x128xf32>
    %167 = arith.subf %91, %166 : vector<1x128xf32>
    %c0_53 = arith.constant 0 : index
    %c0_54 = arith.constant 0 : index
    %168 = vector.load %arg1[%c0_53, %c0_54] : memref<1x128xf32, #tpu.memory_space<vmem>>, vector<1x128xf32>
    tpu.vector_store %arg1[%c0_53, %c0_54], %167 {strides = array<i32>} : memref<1x128xf32, #tpu.memory_space<vmem>>, vector<1x128xf32>,
    return
  }
}

</mosaic_0001>

<llo_original>
// kernel: squeeze.15
$region0: #{squeeze.15}
  %s0 = inlined_call_operand.vmem [shape: f32[2,1,16,16], index: 0, kind: input, shape index: {}]
  %s1 = inlined_call_operand.vmem [shape: f32[512], index: 1, kind: output, shape index: {}]
  $region1: #{squeeze.15} parent=0
    #allocation0 [shape = 'u8[4096]{0}', space=vmem, size = 0x1000, scoped, tag = 'scoped mem for output reshape']
    %v2 = vld [vmem:[%s0] ss:$8 sm:$0xf]
    %vm3 = vcmask 130048
    %4 = vst.msk [vmem:[#allocation0] sm:$0xf] %vm3, %v2
    %s5 = scalar_lea.vmem %s0, 7
    %v6 = vld [vmem:[%s5] ss:$8 sm:$0xf]
    %7 = vrot.lane.b32.xlu0 %v6, 112
    %v8 = vpop.permute.xlu0 %7
    %vm9 = vcmask 1048448
    %10 = vst.msk [vmem:[#allocation0] sm:$0xf] %vm9, %v8
    %s11 = scalar_lea.vmem %s0, 6
    %v12 = vld [vmem:[%s11] ss:$8 sm:$0xf]
    %13 = vrot.lane.b32.xlu0 %v12, 96
    %v14 = vpop.permute.xlu0 %13
    %vm15 = vcmask 917248
    %16 = vst.msk [vmem:[#allocation0] sm:$0xf] %vm15, %v14
    %s17 = scalar_lea.vmem %s0, 5
    %v18 = vld [vmem:[%s17] ss:$8 sm:$0xf]
    %19 = vrot.lane.b32.xlu0 %v18, 80
    %v20 = vpop.permute.xlu0 %19
    %vm21 = vcmask 786048
    %22 = vst.msk [vmem:[#allocation0] sm:$0xf] %vm21, %v20
    %s23 = scalar_lea.vmem %s0, 4
    %v24 = vld [vmem:[%s23] ss:$8 sm:$0xf]
    %25 = vrot.lane.b32.xlu0 %v24, 64
    %v26 = vpop.permute.xlu0 %25
    %vm27 = vcmask 654848
    %28 = vst.msk [vmem:[#allocation0] sm:$0xf] %vm27, %v26
    %s29 = scalar_lea.vmem %s0, 3
    %v30 = vld [vmem:[%s29] ss:$8 sm:$0xf]
    %31 = vrot.lane.b32.xlu0 %v30, 48
    %v32 = vpop.permute.xlu0 %31
    %vm33 = vcmask 523648
    %34 = vst.msk [vmem:[#allocation0] sm:$0xf] %vm33, %v32
    %s35 = scalar_lea.vmem %s0, 2
    %v36 = vld [vmem:[%s35] ss:$8 sm:$0xf]
    %37 = vrot.lane.b32.xlu0 %v36, 32
    %v38 = vpop.permute.xlu0 %37
    %vm39 = vcmask 392448
    %40 = vst.msk [vmem:[#allocation0] sm:$0xf] %vm39, %v38
    %s41 = scalar_lea.vmem %s0, 1
    %v42 = vld [vmem:[%s41] ss:$8 sm:$0xf]
    %43 = vrot.lane.b32.xlu0 %v42, 16
    %v44 = vpop.permute.xlu0 %43
    %vm45 = vcmask 261248
    %46 = vst.msk [vmem:[#allocation0] sm:$0xf] %vm45, %v44
    %s48 = ssub.s32 16, 1
    %v49 = vld [vmem:[#allocation0] sm:%s48]
    %s51 = ssub.s32 16, 1
    %52 = vst [vmem:[%s1] sm:%s51] %v49

// kernel: detector_loss.2
$region0: #{detector_loss.2}
  #allocation0 [shape = 'u32[]', space=smem, size = 0x4, offset = 0x4, fixed_abs, tag = 'smem constant byte address 0x4 - core index']
  #allocation1 [shape = 'u32[72,128]{1,0:T(1,128)}', space=vmem, size = 0x9000, scoped, tag = 'internal scratch']
  #allocation2 [shape = 'f32[8,128]{1,0:T(8,128)}', space=vmem, size = 0x1000, scoped, tag = 'scratch operand']
  %s0 = inlined_call_operand.vmem [shape: f32[16,128], index: 0, kind: input, shape index: {}]
  %s1 = inlined_call_operand.vmem [shape: f32[2,8,128], index: 1, kind: output, shape index: {}]
  %s2 = sld [smem:[#allocation0]]
  $region45: #{detector_loss.2} parent=0
    _
  %s4 = ssub.s32 1, %s2
  %s5 = scalar_select 0, %s4, %s2
  loop: start=0, step=1, limit=4
  $region2: #{detector_loss.2} parent=0 // loop_pre_header
    _
  $region3: #{detector_loss.2} parent=0 // loop_header
    %s7 = sphi 0, %s11
    %p8 = scmp.ge.s32.totalorder %s7, 4
    %s14 = sphi 0, %s26
    %s15 = sphi 0, %s22
    %s16 = sphi 0, %s14
    %s17 = sphi 0, %s15
    %s18 = sphi 0, %s16
    %s19 = sphi 0, %s17
    %s31 = sphi 0, %s33
    %s34 = sphi 0, %s31
    %s35 = sphi 0, %s34
    %s51 = sphi 0, %s35
    %s57 = sphi 0, %s59
    %s60 = sphi 0, %s57
    %s61 = sphi 0, %s60
    %s77 = sphi 0, %s61
  $region4: #{detector_loss.2} parent=0 // loop_header_branch
    %10 = sbr.rel (%p8) target = $region8
  $region5: #{detector_loss.2} parent=0 // loop_body
    %s12 = ssub.s32 %s7, 1
    %s13 = ssub.s32 %s7, 2
    %s20 = sadd.s32 1, %s15
    %p21 = scmp.ge.s32.totalorder %s20, 1
    %s22 = scalar_select %p21, 0, %s20
    %s23 = sadd.s32 1, %s14
    %s24 = scalar_select %p21, %s23, %s14
    %p25 = scmp.ge.s32.totalorder %s24, 2
    %s26 = scalar_select %p25, 0, %s24
    %s27 = sadd.s32 %s14, %s15
    %s28 = sadd.s32 %s26, %s22
    %s29 = ssub.s32 %s27, %s28
    %p30 = scmp.eq.s32.totalorder %s29, 0
    %s32 = sadd.s32 %s31, 1
    %s33 = scalar_select %p30, %s31, %s32
    %p36 = pneg %p30
    %p37 = scmp.eq.s32.totalorder %s7, 1
    %p38 = por %p36, %p37
    %p39 = scmp.ne.s32.totalorder %s31, %s34
    %p40 = scmp.eq.s32.totalorder %s7, 0
    %p41 = por %p39, %p40
    %p42 = scmp.ne.s32.totalorder %s31, %s34
    %p43 = scmp.eq.s32.totalorder %s12, 1
    %p44 = por %p42, %p43
    %p45 = scmp.ne.s32.totalorder %s34, %s35
    %p46 = scmp.eq.s32.totalorder %s12, 0
    %p47 = por %p45, %p46
    %p48 = scmp.ne.s32.totalorder %s34, %s35
    %p49 = scmp.eq.s32.totalorder %s13, 1
    %p50 = por %p48, %p49
    %p52 = scmp.ne.s32.totalorder %s35, %s51
    %p53 = scmp.eq.s32.totalorder %s13, 0
    %p54 = por %p52, %p53
    %s55 = ssub.s32 %s14, %s26
    %p56 = scmp.eq.s32.totalorder %s55, 0
    %s58 = sadd.s32 %s57, 1
    %s59 = scalar_select %p56, %s57, %s58
    %p62 = pneg %p56
    %p63 = scmp.eq.s32.totalorder %s7, 1
    %p64 = por %p62, %p63
    %p65 = scmp.ne.s32.totalorder %s57, %s60
    %p66 = scmp.eq.s32.totalorder %s7, 0
    %p67 = por %p65, %p66
    %p68 = scmp.ne.s32.totalorder %s57, %s60
    %p69 = scmp.eq.s32.totalorder %s12, 1
    %p70 = por %p68, %p69
    %p71 = scmp.ne.s32.totalorder %s60, %s61
    %p72 = scmp.eq.s32.totalorder %s12, 0
    %p73 = por %p71, %p72
    %p74 = scmp.ne.s32.totalorder %s60, %s61
    %p75 = scmp.eq.s32.totalorder %s13, 1
    %p76 = por %p74, %p75
    %p78 = scmp.ne.s32.totalorder %s61, %s77
    %p79 = scmp.eq.s32.totalorder %s13, 0
    %p80 = por %p78, %p79
    %p81 = scmp.le.s32.totalorder 1, %s7
    %p82 = scmp.lt.s32.totalorder %s7, 3
    %p83 = pnand %p81, %p82
    %p84 = pneg %p83
    // Predicated region
    $region9: #{detector_loss.2} parent=5 // pred_check
      _
    $region10: #{detector_loss.2} parent=5 // pred_check_branch
      %86 = sbr.rel (%p83) target = $region12
    $region11: #{detector_loss.2} parent=5 // pred_region
      %s87 = ssub.s32 %s7, 1
    $region12: #{detector_loss.2} parent=5 // pred_fallthru
      _
    %p88 = scmp.lt.s32.totalorder %s7, 2
    // Predicated region
    $region13: #{detector_loss.2} parent=5 // pred_check
      %p89 = pneg %p88
    $region14: #{detector_loss.2} parent=5 // pred_check_branch
      %91 = sbr.rel (%p89) target = $region16
    $region15: #{detector_loss.2} parent=5 // pred_region
      // Predicated region
      $region17: #{detector_loss.2} parent=15 // pred_check
        %p92 = pneg %p41
      $region18: #{detector_loss.2} parent=15 // pred_check_branch
        %94 = sbr.rel (%p92) target = $region20
      $region19: #{detector_loss.2} parent=15 // pred_region
        %s95 = sadd.s32 %s14, %s15
        %p96 = scmp.lt.s32.totalorder %s95, 1
        %s97 = scalar_select %p96, %s95, 1
        %s98 = smul.addr %s97, 8
        %s99 = scalar_lea.vmem %s0, %s98
        %s100 = sadd.s32 %s14, %s15
      $region20: #{detector_loss.2} parent=15 // pred_fallthru
        _
    $region16: #{detector_loss.2} parent=5 // pred_fallthru
      _
    %p101 = scmp.le.s32.totalorder 1, %s7
    %p102 = scmp.lt.s32.totalorder %s7, 3
    %p103 = pnand %p101, %p102
    %p104 = pneg %p103
    // Predicated region
    $region21: #{detector_loss.2} parent=5 // pred_check
      _
    $region22: #{detector_loss.2} parent=5 // pred_check_branch
      %106 = sbr.rel (%p103) target = $region24
    $region23: #{detector_loss.2} parent=5 // pred_region
      %s107 = ssub.s32 %s7, 1
      %s108 = sadd.s32 %s16, %s17
      %p109 = scmp.lt.s32.totalorder %s108, 1
      %s110 = scalar_select %p109, %s108, 1
      %s111 = smul.addr %s110, 8
      %s112 = scalar_lea.vmem %s0, %s111
      %p113 = pneg %p47
      %p114 = pneg %p44
      %p115 = pneg %p73
      %p116 = pneg %p70
      %p117 = scmp.lt.s32.totalorder %s16, 1
      %s118 = scalar_select %p117, %s16, 1
      %s119 = smul.addr %s118, 8
      %s120 = scalar_lea.vmem %s1, %s119
      %s121 = sadd.s32 %s16, %s17
      %p122 = scmp.lt.s32.totalorder %s121, 1
      %s123 = scalar_select %p122, %s121, 1
      %s124 = smul.addr %s123, 8
      %s125 = scalar_lea.vmem %s0, %s124
      %s126 = sadd.s32 %s16, %s17
      %p127 = scmp.lt.s32.totalorder %s16, 1
      %s128 = scalar_select %p127, %s16, 1
      %s129 = smul.addr %s128, 8
      %s130 = scalar_lea.vmem %s1, %s129
      %p131 = scmp.eq.s32.totalorder %s17, 0
      // Predicated region
      $region25: #{detector_loss.2} parent=23 // pred_check
        %p132 = pneg %p131
      $region26: #{detector_loss.2} parent=23 // pred_check_branch
        %134 = sbr.rel (%p132) target = $region28
      $region27: #{detector_loss.2} parent=23 // pred_region
        %135 = vst [vmem:[#allocation2] sm:$0xff] 0.0
      $region28: #{detector_loss.2} parent=23 // pred_fallthru
        _
      %v136 = vld [vmem:[%s125] sm:$0xff]
      %v137 = vand.u32 2147483647, %v136
      %vm138 = vcmp.lt.f32.partialorder %v137, 1.0
      %v139 = vmul.f32 %v136, 0.5
      %v140 = vmul.f32 %v139, %v136
      %v141 = vsub.f32 %v137, 0.5
      %v142 = vsel %vm138, %v140, %v141
      %v143 = vmul.f32 %v142, 0.75
      %v144 = vld [vmem:[#allocation2] sm:$0xff]
      %v145 = vadd.f32 %v143, 0.0
      %v146 = vadd.f32 %v144, %v145
      %147 = vst [vmem:[#allocation2] sm:$0xff] %v146
      // Predicated region
      $region29: #{detector_loss.2} parent=23 // pred_check
        %p148 = pneg %p131
      $region30: #{detector_loss.2} parent=23 // pred_check_branch
        %150 = sbr.rel (%p148) target = $region32
      $region31: #{detector_loss.2} parent=23 // pred_region
        %v151 = vld [vmem:[#allocation2] sm:$0xff]
        %152 = vst [vmem:[%s130] sm:$0xff] %v151
      $region32: #{detector_loss.2} parent=23 // pred_fallthru
        _
      %p153 = scmp.lt.s32.totalorder %s16, 1
      %s154 = scalar_select %p153, %s16, 1
      %s155 = smul.addr %s154, 8
      %s156 = scalar_lea.vmem %s1, %s155
      // Predicated region
      $region33: #{detector_loss.2} parent=23 // pred_check
        %p157 = pneg %p70
      $region34: #{detector_loss.2} parent=23 // pred_check_branch
        %159 = sbr.rel (%p157) target = $region36
      $region35: #{detector_loss.2} parent=23 // pred_region
        _
      $region36: #{detector_loss.2} parent=23 // pred_fallthru
        _
    $region24: #{detector_loss.2} parent=5 // pred_fallthru
      _
    %p160 = scmp.le.s32.totalorder 2, %s7
    // Predicated region
    $region37: #{detector_loss.2} parent=5 // pred_check
      %p161 = pneg %p160
    $region38: #{detector_loss.2} parent=5 // pred_check_branch
      %163 = sbr.rel (%p161) target = $region40
    $region39: #{detector_loss.2} parent=5 // pred_region
      %s164 = ssub.s32 %s7, 2
      // Predicated region
      $region41: #{detector_loss.2} parent=39 // pred_check
        %p165 = pneg %p76
      $region42: #{detector_loss.2} parent=39 // pred_check_branch
        %167 = sbr.rel (%p165) target = $region44
      $region43: #{detector_loss.2} parent=39 // pred_region
        %p168 = scmp.lt.s32.totalorder %s18, 1
        %s169 = scalar_select %p168, %s18, 1
        %s170 = smul.addr %s169, 8
        %s171 = scalar_lea.vmem %s1, %s170
      $region44: #{detector_loss.2} parent=39 // pred_fallthru
        _
    $region40: #{detector_loss.2} parent=5 // pred_fallthru
      _
  $region6: #{detector_loss.2} parent=0 // loop_footer
    %s11 = sadd.s32 1, %s7
  $region7: #{detector_loss.2} parent=0 // loop_footer_branch
    %6 = sbr.rel target = $region3
  $region8: #{detector_loss.2} parent=0 // loop_exit
    _

// kernel: detector_loss.3
$region0: #{detector_loss.3}
  #allocation0 [shape = 'u32[]', space=smem, size = 0x4, offset = 0x4, fixed_abs, tag = 'smem constant byte address 0x4 - core index']
  #allocation1 [shape = 'u32[72,128]{1,0:T(1,128)}', space=vmem, size = 0x9000, scoped, tag = 'internal scratch']
  %s0 = inlined_call_operand.vmem [shape: f32[10,1,128], index: 0, kind: input, shape index: {}]
  %s1 = inlined_call_operand.vmem [shape: f32[1,128], index: 1, kind: output, shape index: {}]
  %s2 = sld [smem:[#allocation0]]
  $region14: #{detector_loss.3} parent=0
    _
  %s4 = ssub.s32 1, %s2
  %s5 = scalar_select 0, %s4, %s2
  // Predicated region
  $region2: #{detector_loss.3} parent=0 // pred_check
    _
  $region3: #{detector_loss.3} parent=0 // pred_check_branch
    %7 = sbr.rel (0) target = $region5
  $region4: #{detector_loss.3} parent=0 // pred_region
    _
  $region5: #{detector_loss.3} parent=0 // pred_fallthru
    _
  %v8 = vld [vmem:[%s0] sm:$0x1]
  %s9 = scalar_lea.vmem %s0, 1
  %v10 = vld [vmem:[%s9] sm:$0x1]
  %s11 = scalar_lea.vmem %s0, 2
  %v12 = vld [vmem:[%s11] sm:$0x1]
  %s13 = scalar_lea.vmem %s0, 3
  %v14 = vld [vmem:[%s13] sm:$0x1]
  %s15 = scalar_lea.vmem %s0, 4
  %v16 = vld [vmem:[%s15] sm:$0x1]
  %s17 = scalar_lea.vmem %s0, 5
  %v18 = vld [vmem:[%s17] sm:$0x1]
  %s19 = scalar_lea.vmem %s0, 6
  %v20 = vld [vmem:[%s19] sm:$0x1]
  %s21 = scalar_lea.vmem %s0, 7
  %v22 = vld [vmem:[%s21] sm:$0x1]
  %s23 = scalar_lea.vmem %s0, 8
  %v24 = vld [vmem:[%s23] sm:$0x1]
  %s25 = scalar_lea.vmem %s0, 9
  %v26 = vld [vmem:[%s25] sm:$0x1]
  %v27 = vtanh.pop %v8
  %v28 = vadd.f32 %v27, %v16
  %v29 = vtanh.pop %v10
  %v30 = vadd.f32 %v29, %v18
  %v31 = vmul.f32 %v12, 0.5
  %v32 = vtanh.pop %v31
  %v33 = vmul.f32 %v32, 0.5
  %v34 = vadd.f32 %v33, 0.5
  %v35 = vmul.f32 %v34, 16.0
  %v36 = vmul.f32 %v14, 0.5
  %v37 = vtanh.pop %v36
  %v38 = vmul.f32 %v37, 0.5
  %v39 = vadd.f32 %v38, 0.5
  %v40 = vmul.f32 %v39, 16.0
  %v41 = vmul.f32 %v35, 0.5
  %v42 = vsub.f32 %v28, %v41
  %v43 = vadd.f32 %v28, %v41
  %v44 = vmul.f32 %v40, 0.5
  %v45 = vsub.f32 %v30, %v44
  %v46 = vadd.f32 %v30, %v44
  %v47 = vmul.f32 %v24, 0.5
  %v48 = vsub.f32 %v20, %v47
  %v49 = vadd.f32 %v20, %v47
  %v50 = vmul.f32 %v26, 0.5
  %v51 = vsub.f32 %v22, %v50
  %v52 = vadd.f32 %v22, %v50
  %v53 = vmin.f32 %v43, %v49
  %v54 = vmax.f32 %v42, %v48
  %v55 = vsub.f32 %v53, %v54
  %v56 = vmax.f32 %v55, 0.0
  %v57 = vmin.f32 %v46, %v52
  %v58 = vmax.f32 %v45, %v51
  %v59 = vsub.f32 %v57, %v58
  %v60 = vmax.f32 %v59, 0.0
  %v61 = vmul.f32 %v56, %v60
  %v62 = vsub.f32 %v43, %v42
  %v63 = vsub.f32 %v46, %v45
  %v64 = vadd.f32 %v63, 1e-07
  %v65 = vsub.f32 %v49, %v48
  %v66 = vsub.f32 %v52, %v51
  %v67 = vadd.f32 %v66, 1e-07
  %v68 = vmul.f32 %v62, %v64
  %v69 = vmul.f32 %v65, %v67
  %v70 = vadd.f32 %v68, %v69
  %v71 = vsub.f32 %v70, %v61
  %v72 = vadd.f32 %v71, 1e-07
  %v73 = vrcp.pop %v72
  %v74 = vmul.f32 %v72, %v73
  %v75 = vsub.f32 1.0, %v74
  %v76 = vmul.f32 %v73, %v75
  %v77 = vadd.f32 %v73, %v76
  %vm78 = vweird.f32 %v72
  %vm79 = vweird.f32 %v73
  %vm80 = vmor %vm78, %vm79
  %v81 = vsel %vm80, %v73, %v77
  %v82 = vand.u32 2147483647, %v72
  %vm83 = vcmp.eq.f32.partialorder %v82, 8.507059e+37
  %v84 = vand.u32 %v72, 2147483648
  %v85 = vor.u32 1.1754944e-38, %v84
  %v86 = vsel %vm83, %v85, %v81
  %v87 = vmul.f32 %v61, %v86
  %v88 = vmax.f32 %v43, %v49
  %v89 = vmin.f32 %v42, %v48
  %v90 = vsub.f32 %v88, %v89
  %v91 = vmax.f32 %v46, %v52
  %v92 = vmin.f32 %v45, %v51
  %v93 = vsub.f32 %v91, %v92
  %v94 = vadd.f32 %v48, %v49
  %v95 = vsub.f32 %v94, %v42
  %v96 = vsub.f32 %v95, %v43
  %v97 = vmul.f32 %v96, 0.5
  %v98 = vadd.f32 %v51, %v52
  %v99 = vsub.f32 %v98, %v45
  %v100 = vsub.f32 %v99, %v46
  %v101 = vmul.f32 %v100, 0.5
  %v102 = vmul.f32 %v97, %v97
  %v103 = vmul.f32 %v101, %v101
  %v104 = vadd.f32 %v102, %v103
  %v105 = vrsqrt.pop %v104
  %v106 = vmul.f32 %v105, %v104
  %v107 = vmul.f32 %v106, %v105
  %v108 = vmul.f32 0.5, %v107
  %v109 = vsub.f32 1.5, %v108
  %v110 = vmul.f32 %v105, %v109
  %v111 = vmul.f32 %v104, %v110
  %vm112 = vcmp.eq.f32.partialorder %v104, inf
  %v113 = vsel %vm112, %v104, %v111
  %vm114 = vcmp.eq.f32.partialorder %v104, 0.0
  %v115 = vand.u32 %v104, 2147483648
  %v116 = vsel %vm114, %v115, %v113
  %v117 = vand.u32 2147483647, %v97
  %v118 = vrcp.pop %v116
  %v119 = vmul.f32 %v116, %v118
  %v120 = vsub.f32 1.0, %v119
  %v121 = vmul.f32 %v118, %v120
  %v122 = vadd.f32 %v118, %v121
  %vm123 = vweird.f32 %v116
  %vm124 = vweird.f32 %v118
  %vm125 = vmor %vm123, %vm124
  %v126 = vsel %vm125, %v118, %v122
  %v127 = vand.u32 2147483647, %v116
  %vm128 = vcmp.eq.f32.partialorder %v127, 8.507059e+37
  %v129 = vand.u32 %v116, 2147483648
  %v130 = vor.u32 1.1754944e-38, %v129
  %v131 = vsel %vm128, %v130, %v126
  %v132 = vmul.f32 %v117, %v131
  %v133 = vand.u32 2147483647, %v101
  %v134 = vmul.f32 %v133, %v131
  %vm135 = vcmp.gt.f32.partialorder %v132, 0.70710677
  %v136 = vsel %vm135, %v134, %v132
  %v137 = vmul.f32 %v136, 2.0
  %v138 = vmul.f32 %v136, %v136
  %v139 = vsub.f32 1.0, %v138
  %v140 = vmax.f32 %v139, 0.0
  %v141 = vrsqrt.pop %v140
  %v142 = vmul.f32 %v141, %v140
  %v143 = vmul.f32 %v142, %v141
  %v144 = vmul.f32 0.5, %v143
  %v145 = vsub.f32 1.5, %v144
  %v146 = vmul.f32 %v141, %v145
  %v147 = vmul.f32 %v140, %v146
  %vm148 = vcmp.eq.f32.partialorder %v140, inf
  %v149 = vsel %vm148, %v140, %v147
  %vm150 = vcmp.eq.f32.partialorder %v140, 0.0
  %v151 = vand.u32 %v140, 2147483648
  %v152 = vsel %vm150, %v151, %v149
  %v153 = vmul.f32 %v137, %v152
  %v154 = vrcp.pop %v90
  %v155 = vmul.f32 %v90, %v154
  %v156 = vsub.f32 1.0, %v155
  %v157 = vmul.f32 %v154, %v156
  %v158 = vadd.f32 %v154, %v157
  %vm159 = vweird.f32 %v90
  %vm160 = vweird.f32 %v154
  %vm161 = vmor %vm159, %vm160
  %v162 = vsel %vm161, %v154, %v158
  %v163 = vand.u32 2147483647, %v90
  %vm164 = vcmp.eq.f32.partialorder %v163, 8.507059e+37
  %v165 = vand.u32 %v90, 2147483648
  %v166 = vor.u32 1.1754944e-38, %v165
  %v167 = vsel %vm164, %v166, %v162
  %v168 = vmul.f32 %v97, %v167
  %v169 = vmul.f32 %v168, %v168
  %v170 = vrcp.pop %v93
  %v171 = vmul.f32 %v93, %v170
  %v172 = vsub.f32 1.0, %v171
  %v173 = vmul.f32 %v170, %v172
  %v174 = vadd.f32 %v170, %v173
  %vm175 = vweird.f32 %v93
  %vm176 = vweird.f32 %v170
  %vm177 = vmor %vm175, %vm176
  %v178 = vsel %vm177, %v170, %v174
  %v179 = vand.u32 2147483647, %v93
  %vm180 = vcmp.eq.f32.partialorder %v179, 8.507059e+37
  %v181 = vand.u32 %v93, 2147483648
  %v182 = vor.u32 1.1754944e-38, %v181
  %v183 = vsel %vm180, %v182, %v178
  %v184 = vmul.f32 %v101, %v183
  %v185 = vmul.f32 %v184, %v184
  %v186 = vsub.f32 %v153, 2.0
  %v187 = vmul.f32 %v186, %v169
  %v188 = vmul.f32 %v187, 1.442695
  %v189 = vpow.pop %v188
  %v190 = vsub.f32 2.0, %v189
  %v191 = vmul.f32 %v186, %v185
  %v192 = vmul.f32 %v191, 1.442695
  %v193 = vpow.pop %v192
  %v194 = vsub.f32 %v190, %v193
  %v195 = vsub.f32 %v62, %v65
  %v196 = vand.u32 2147483647, %v195
  %v197 = vmax.f32 %v62, %v65
  %v198 = vrcp.pop %v197
  %v199 = vmul.f32 %v197, %v198
  %v200 = vsub.f32 1.0, %v199
  %v201 = vmul.f32 %v198, %v200
  %v202 = vadd.f32 %v198, %v201
  %vm203 = vweird.f32 %v197
  %vm204 = vweird.f32 %v198
  %vm205 = vmor %vm203, %vm204
  %v206 = vsel %vm205, %v198, %v202
  %v207 = vand.u32 2147483647, %v197
  %vm208 = vcmp.eq.f32.partialorder %v207, 8.507059e+37
  %v209 = vand.u32 %v197, 2147483648
  %v210 = vor.u32 1.1754944e-38, %v209
  %v211 = vsel %vm208, %v210, %v206
  %v212 = vmul.f32 %v196, %v211
  %v213 = vsub.f32 %v64, %v67
  %v214 = vand.u32 2147483647, %v213
  %v215 = vmax.f32 %v64, %v67
  %v216 = vrcp.pop %v215
  %v217 = vmul.f32 %v215, %v216
  %v218 = vsub.f32 1.0, %v217
  %v219 = vmul.f32 %v216, %v218
  %v220 = vadd.f32 %v216, %v219
  %vm221 = vweird.f32 %v215
  %vm222 = vweird.f32 %v216
  %vm223 = vmor %vm221, %vm222
  %v224 = vsel %vm223, %v216, %v220
  %v225 = vand.u32 2147483647, %v215
  %vm226 = vcmp.eq.f32.partialorder %v225, 8.507059e+37
  %v227 = vand.u32 %v215, 2147483648
  %v228 = vor.u32 1.1754944e-38, %v227
  %v229 = vsel %vm226, %v228, %v224
  %v230 = vmul.f32 %v214, %v229
  %v231 = vsub.f32 0.0, %v212
  %v232 = vmul.f32 %v231, 1.442695
  %v233 = vpow.pop %v232
  %v234 = vsub.f32 1.0, %v233
  %v235 = vmul.f32 %v234, %v234
  %v236 = vsub.f32 0.0, %v230
  %v237 = vmul.f32 %v236, 1.442695
  %v238 = vpow.pop %v237
  %v239 = vsub.f32 1.0, %v238
  %v240 = vmul.f32 %v239, %v239
  %v241 = vmul.f32 %v235, %v235
  %v242 = vmul.f32 %v240, %v240
  %v243 = vadd.f32 %v241, %v242
  %v244 = vadd.f32 %v194, %v243
  %v245 = vmul.f32 %v244, 0.5
  %v246 = vsub.f32 %v87, %v245
  %247 = vst [vmem:[%s1] sm:$0x1] %v246
  // Predicated region
  $region6: #{detector_loss.3} parent=0 // pred_check
    _
  $region7: #{detector_loss.3} parent=0 // pred_check_branch
    %249 = sbr.rel (0) target = $region9
  $region8: #{detector_loss.3} parent=0 // pred_region
    _
  $region9: #{detector_loss.3} parent=0 // pred_fallthru
    _
  // Predicated region
  $region10: #{detector_loss.3} parent=0 // pred_check
    _
  $region11: #{detector_loss.3} parent=0 // pred_check_branch
    %251 = sbr.rel (0) target = $region13
  $region12: #{detector_loss.3} parent=0 // pred_region
    _
  $region13: #{detector_loss.3} parent=0 // pred_fallthru
    _

</llo_original>
